<compile_context>
chip_gen: v7x
topology: tpu7x:2x2x1
jax: 0.10.0
libtpu: 0.0.40
codegen_flags: <defaults>
</compile_context>

<pallas_src>
import functools
from typing import NamedTuple

import jax
import jax.numpy as jnp
import numpy as np
from jax.experimental import pallas as pl
from jax.experimental.pallas import tpu as pltpu


def _round_up(x, m):
    return ((x + m - 1) // m) * m


def _vmem_capacity_bytes():
    """Physical VMEM per TensorCore (generation-aware), with a safe fallback."""
    try:
        info = pltpu.get_tpu_info()
        cap = int(getattr(info, "vmem_capacity_bytes", 0))
        if cap > 0:
            return cap
    except Exception:
        pass
    return 64 << 20  # v7x per-TC size; safe lower bound for every generation


# ---------------------------------------------------------------------------
# Kernel body. Grid = (batch_tiles, class_tiles); class axis is innermost.
#   class-tile 0 : h = x @ W1' + b1'  (eval-BN folded into W1'/b1')
#                  [-> LeakyReLU(0.1)]; stored once into the VMEM scratch h_ref.
#   every tile   : logits_tile = h @ W2[:, j] + b2[j]
# ---------------------------------------------------------------------------
def classblock_kernel(x_ref, w1_ref, b1_ref, w2_ref, b2_ref, out_ref, h_ref, *, relu):
    @pl.when(pl.program_id(1) == 0)
    def _():
        h = jnp.dot(x_ref[...].astype(w1_ref.dtype), w1_ref[...],
                    preferred_element_type=jnp.float32)
        h = h + b1_ref[...]                      # f32 VPU add (bias + BN shift)
        if relu:                                 # LeakyReLU(0.1) when enabled
            h = jnp.where(h >= 0, h, 0.1 * h)
        # TODO(synk): Dropout(p=droprate) is train-time stochastic; eval-mode
        #             forward is the identity, which is what we implement.
        h_ref[...] = h.astype(h_ref.dtype)       # reused across class tiles

    logits = jnp.dot(h_ref[...], w2_ref[...],
                     preferred_element_type=jnp.float32) + b2_ref[...]
    out_ref[...] = logits.astype(out_ref.dtype)


class PreparedClassBlock(NamedTuple):
    w1p: jax.Array     # (Dp, Np) compute dtype, eval-BN folded
    b1p: jax.Array     # (1, Np)  f32, eval-BN folded
    w2p: jax.Array     # (Np, Cp) compute dtype
    b2p: jax.Array     # (1, Cp)  f32
    dims: tuple        # (D, N, C) original feature dims


def prepare_class_block(params, *, compute_dtype=jnp.bfloat16, eps=1e-5):
    """One-time parameter glue (hoisted out of the per-call hot path):
    fold eval-mode BatchNorm1d into the first Linear, zero-pad every feature dim
    to a multiple of 128 (lane-dense) and cast to the MXU compute dtype."""
    w1, b1, bn_gamma, bn_beta, bn_mean, bn_var, w2, b2 = params
    D, N = w1.shape
    C = w2.shape[1]

    scale = bn_gamma / jnp.sqrt(bn_var + eps)              # [N]
    w1f = w1 * scale[None, :]                              # W1' = W1 * scale
    b1f = (b1 - bn_mean) * scale + bn_beta                 # b1' folded

    Dp, Np, Cp = (_round_up(d, 128) for d in (D, N, C))

    w1p = jnp.zeros((Dp, Np), compute_dtype).at[:D, :N].set(w1f.astype(compute_dtype))
    b1p = jnp.zeros((1, Np), jnp.float32).at[0, :N].set(b1f.astype(jnp.float32))
    w2p = jnp.zeros((Np, Cp), compute_dtype).at[:N, :C].set(w2.astype(compute_dtype))
    b2p = jnp.zeros((1, Cp), jnp.float32).at[0, :C].set(b2.astype(jnp.float32))
    return PreparedClassBlock(w1p, b1p, w2p, b2p, (D, N, C))


def class_block_forward(x, prepared, *, relu=False, out_dtype=jnp.float32,
                        max_batch_tile=1024):
    """x: [B, input_dim] -> logits [B, class_num] (eval-mode ClassBlock forward)."""
    w1p, b1p, w2p, b2p, (D, N, C) = prepared
    B = x.shape[0]
    assert x.shape[1] == D, "input feature dim mismatch"

    compute_dtype = w1p.dtype
    itm = jnp.dtype(compute_dtype).itemsize
    out_itm = jnp.dtype(out_dtype).itemsize
    sub = 8 * (4 // itm)                     # sublane packing: 8 (f32) / 16 (bf16)

    Dp, Np = w1p.shape
    Cp = w2p.shape[1]

    # ---- activations: pad only when necessary (skip HBM round-trips) --------
    need_pad = (D != Dp) or (B % sub != 0)
    if need_pad:
        B_eff = _round_up(B, sub)
        x_in = jnp.zeros((B_eff, Dp), compute_dtype).at[:B, :D].set(
            x.astype(compute_dtype))
    else:
        B_eff = B
        x_in = x                             # bf16 cast happens in-kernel
    x_itm = jnp.dtype(x_in.dtype).itemsize

    # ---- generation-aware VMEM budget ----------------------------------------
    vmem_limit = int(_vmem_capacity_bytes() * 0.85)  # headroom for Mosaic scratch
    headroom = 6 << 20
    # Budget "resident" weights at 2x: the pipeline double-buffers them unless
    # pl.Buffered(1) is honored (we request it, but budget for the fallback).
    w1_bytes = 2 * (Dp * Np * itm + Np * 4)
    budget = vmem_limit - headroom - w1_bytes
    if budget < (1 << 20):
        raise ValueError("bottleneck weights do not fit in the VMEM budget")

    # ---- class tiling: keep W2 resident when it fits, else tile over C ------
    w2_bytes = 2 * (Np * Cp * itm + Cp * 4)
    if w2_bytes <= budget // 2:
        TC, nc = Cp, 1
    else:
        TC = ((budget // 2) // (2 * Np * itm)) // 128 * 128
        TC = int(max(128, min(TC, Cp)))
        nc = pl.cdiv(Cp, TC)
    budget -= 2 * (Np * TC * itm + TC * 4)

    # ---- batch tiling: balanced, sublane-aligned, >=2 tiles when possible ---
    max_batch_tile = max(sub, (int(max_batch_tile) // sub) * sub)
    per_row = 2 * Dp * x_itm + 2 * TC * out_itm + Np * itm   # x + out (dbuf) + h
    tb_vmem = max(sub, (budget // per_row) // sub * sub)
    tb_cap = max(sub, min(max_batch_tile, tb_vmem))
    min_tiles = 2 if B_eff >= 2 * sub else 1      # give both v7x TCs work
    n_tiles = max(pl.cdiv(B_eff, tb_cap), min_tiles)
    TB = min(_round_up(pl.cdiv(B_eff, n_tiles), sub), _round_up(B_eff, sub))
    assert TB % sub == 0 and TB >= sub, "batch tile must be sublane aligned"
    nb = pl.cdiv(B_eff, TB)

    grid = (nb, nc)

    cost = pl.CostEstimate(
        flops=2 * B_eff * Dp * Np + 2 * B_eff * Np * Cp,
        transcendentals=0,
        # NOTE: with "parallel" megacore on v7x each TensorCore re-fetches the
        # resident weights, so true weight bytes are ~2x this hint there.
        bytes_accessed=B_eff * Dp * x_itm + (Dp * Np + Np * Cp) * itm
                       + (Np + Cp) * 4 + B_eff * Cp * out_itm,
    )

    kernel = functools.partial(classblock_kernel, relu=relu)
    out_shape = jax.ShapeDtypeStruct((B_eff, Cp), out_dtype)
    scratch_shapes = [pltpu.VMEM((TB, Np), compute_dtype)]   # bottleneck h
    compiler_params = pltpu.CompilerParams(
        dimension_semantics=("parallel", "arbitrary"),
        vmem_limit_bytes=vmem_limit,
    )

    def _run(single_buffer_weights):
        def spec(shape, index_map, resident=False):
            if resident and single_buffer_weights:
                # Constant-index blocks: no need for the pipeline to double-buffer.
                return pl.BlockSpec(shape, index_map, pipeline_mode=pl.Buffered(1))
            return pl.BlockSpec(shape, index_map)

        in_specs = [
            spec((TB, Dp), lambda i, j: (i, 0)),                 # x: batch tiles
            spec((Dp, Np), lambda i, j: (0, 0), resident=True),  # W1 (BN folded)
            spec((1, Np), lambda i, j: (0, 0), resident=True),   # b1 (BN folded)
            spec((Np, TC), lambda i, j: (0, j), resident=(nc == 1)),  # W2
            spec((1, TC), lambda i, j: (0, j), resident=(nc == 1)),   # b2
        ]
        out_specs = pl.BlockSpec((TB, TC), lambda i, j: (i, j))
        return pl.pallas_call(
            kernel,
            out_shape=out_shape,
            grid_spec=pltpu.PrefetchScalarGridSpec(
                num_scalar_prefetch=0,
                grid=grid,
                in_specs=in_specs,
                out_specs=out_specs,
                scratch_shapes=scratch_shapes,
            ),
            compiler_params=compiler_params,
            cost_estimate=cost,
        )(x_in, w1p, b1p, w2p, b2p)

    try:
        out = _run(single_buffer_weights=True)
    except Exception:
        # Fallback if this JAX/Mosaic build rejects pl.Buffered(1) for
        # constant-index (resident) blocks; VMEM budget already assumed 2x.
        out = _run(single_buffer_weights=False)

    if B_eff != B or Cp != C:
        out = out[:B, :C]
    # TODO(synk): return_f=True would also return the bottleneck features; the
    #             default (return_f=False) returns logits only, as here.
    return out


def init_params(key, input_dim, num_bottleneck, class_num):
    """Deterministic init mimicking weights_init_kaiming / weights_init_classifier."""
    k1, k2, k3 = jax.random.split(key, 3)
    # nn.Linear(input_dim, num_bottleneck): kaiming_normal_(a=0, mode='fan_out')
    std1 = np.sqrt(2.0 / num_bottleneck)
    w1 = jax.random.normal(k1, (input_dim, num_bottleneck), jnp.float32) * std1
    b1 = jnp.zeros((num_bottleneck,), jnp.float32)
    # BatchNorm1d: weight ~ N(1.0, 0.02), bias = 0, running stats mean=0, var=1
    bn_gamma = 1.0 + 0.02 * jax.random.normal(k2, (num_bottleneck,), jnp.float32)
    bn_beta = jnp.zeros((num_bottleneck,), jnp.float32)
    bn_mean = jnp.zeros((num_bottleneck,), jnp.float32)
    bn_var = jnp.ones((num_bottleneck,), jnp.float32)
    # Classifier nn.Linear(num_bottleneck, class_num): weight ~ N(0, 0.001), bias = 0
    # NOTE: weights are stored pre-transposed as [in, out] for the kernel.
    w2 = jax.random.normal(k3, (num_bottleneck, class_num), jnp.float32) * 0.001
    b2 = jnp.zeros((class_num,), jnp.float32)
    return (w1, b1, bn_gamma, bn_beta, bn_mean, bn_var, w2, b2)


def class_block_ref(x, params, relu=False):
    """Pure-JAX f32 reference (eval-mode) for the correctness check."""
    w1, b1, g, b, m, v, w2, b2 = params
    h = x @ w1 + b1
    h = (h - m) / jnp.sqrt(v + 1e-5) * g + b
    if relu:
        h = jnp.where(h >= 0, h, 0.1 * h)
    return h @ w2 + b2


if __name__ == "__main__":
    B, input_dim, num_bottleneck, class_num = 8, 64, 32, 16

    key = jax.random.PRNGKey(0)
    kx, kp = jax.random.split(key)
    x = jax.random.normal(kx, (B, input_dim), jnp.float32)
    params = init_params(kp, input_dim, num_bottleneck, class_num)

    # One-time parameter preparation (BN fold + padding + bf16 cast), reused
    # across every forward call.
    prepared = prepare_class_block(params)

    out = class_block_forward(x, prepared)      # bf16 operands, f32 accumulation
    out = jax.block_until_ready(out)

    ref = class_block_ref(x, params)
    # Relaxed tolerance for bf16 operand rounding (f32 accumulation keeps error small).
    np.testing.assert_allclose(np.asarray(out), np.asarray(ref),
                               rtol=5e-2, atol=2e-3)
    assert out.shape == (B, class_num)
    print("KERNEL_OK")
</pallas_src>

<mosaic_0001>
module attributes {stable_mosaic.version = 11 : i64} {
  func.func @classblock_kernel(%arg0: i32, %arg1: i32, %arg2: memref<16x128xbf16, #tpu.memory_space<vmem>>, %arg3: memref<128x128xbf16, #tpu.memory_space<vmem>>, %arg4: memref<1x128xf32, #tpu.memory_space<vmem>>, %arg5: memref<128x128xbf16, #tpu.memory_space<vmem>>, %arg6: memref<1x128xf32, #tpu.memory_space<vmem>>, %arg7: memref<16x128xf32, #tpu.memory_space<vmem>>, %arg8: memref<16x128xbf16, #tpu.memory_space<vmem>>) attributes {dimension_semantics = [#tpu.dimension_semantics<parallel>, #tpu.dimension_semantics<arbitrary>], iteration_bounds = array<i64: 1, 1>, scalar_prefetch = 0 : i64, scratch_operands = 1 : i64, tpu.core_type = #tpu.core_type<tc>, window_params = [{transform_indices = @transform_0, window_bounds = array<i64: 16, 128>}, {pipeline_mode = #tpu.pipeline_mode<synchronous>, transform_indices = @transform_1, window_bounds = array<i64: 128, 128>}, {pipeline_mode = #tpu.pipeline_mode<synchronous>, transform_indices = @transform_2, window_bounds = array<i64: 1, 128>}, {pipeline_mode = #tpu.pipeline_mode<synchronous>, transform_indices = @transform_3, window_bounds = array<i64: 128, 128>}, {pipeline_mode = #tpu.pipeline_mode<synchronous>, transform_indices = @transform_4, window_bounds = array<i64: 1, 128>}, {transform_indices = @transform_5, window_bounds = array<i64: 16, 128>}]} {
    %c0_i32 = arith.constant 0 : i32
    %0 = arith.cmpi eq, %arg1, %c0_i32 : i32
    %1 = arith.extui %0 : i1 to i32
    %c0_i32_0 = arith.constant 0 : i32
    %2 = arith.cmpi ne, %1, %c0_i32_0 : i32
    scf.if %2 {
      %c0_8 = arith.constant 0 : index
      %c0_9 = arith.constant 0 : index
      %10 = vector.load %arg2[%c0_8, %c0_9] : memref<16x128xbf16, #tpu.memory_space<vmem>>, vector<16x128xbf16>
      %c0_10 = arith.constant 0 : index
      %c0_11 = arith.constant 0 : index
      %11 = vector.load %arg3[%c0_10, %c0_11] : memref<128x128xbf16, #tpu.memory_space<vmem>>, vector<128x128xbf16>
      %cst_12 = arith.constant dense<0.000000e+00> : vector<16x128xf32>
      %12 = tpu.matmul %10, %11, %cst_12 {dimension_numbers = #tpu.dot_dimension_numbers<[1], [0], [0], [1], [0, 0, 1, 1], [], []>} : vector<16x128xbf16>, vector<128x128xbf16>, vector<16x128xf32> -> vector<16x128xf32>
      %c0_13 = arith.constant 0 : index
      %c0_14 = arith.constant 0 : index
      %13 = vector.load %arg4[%c0_13, %c0_14] : memref<1x128xf32, #tpu.memory_space<vmem>>, vector<1x128xf32>
      %14 = vector.broadcast %13 : vector<1x128xf32> to vector<16x128xf32>
      %15 = arith.addf %12, %14 : vector<16x128xf32>
      %16 = arith.truncf %15 : vector<16x128xf32> to vector<16x128xbf16>
      %c0_15 = arith.constant 0 : index
      %c0_16 = arith.constant 0 : index
      %17 = vector.load %arg8[%c0_15, %c0_16] : memref<16x128xbf16, #tpu.memory_space<vmem>>, vector<16x128xbf16>
      tpu.vector_store %arg8[%c0_15, %c0_16], %16 {strides = array<i32>} : memref<16x128xbf16, #tpu.memory_space<vmem>>, vector<16x128xbf16>,
    } else {
    }
    %c0 = arith.constant 0 : index
    %c0_1 = arith.constant 0 : index
    %3 = vector.load %arg8[%c0, %c0_1] : memref<16x128xbf16, #tpu.memory_space<vmem>>, vector<16x128xbf16>
    %c0_2 = arith.constant 0 : index
    %c0_3 = arith.constant 0 : index
    %4 = vector.load %arg5[%c0_2, %c0_3] : memref<128x128xbf16, #tpu.memory_space<vmem>>, vector<128x128xbf16>
    %cst = arith.constant dense<0.000000e+00> : vector<16x128xf32>
    %5 = tpu.matmul %3, %4, %cst {dimension_numbers = #tpu.dot_dimension_numbers<[1], [0], [0], [1], [0, 0, 1, 1], [], []>} : vector<16x128xbf16>, vector<128x128xbf16>, vector<16x128xf32> -> vector<16x128xf32>
    %c0_4 = arith.constant 0 : index
    %c0_5 = arith.constant 0 : index
    %6 = vector.load %arg6[%c0_4, %c0_5] : memref<1x128xf32, #tpu.memory_space<vmem>>, vector<1x128xf32>
    %7 = vector.broadcast %6 : vector<1x128xf32> to vector<16x128xf32>
    %8 = arith.addf %5, %7 : vector<16x128xf32>
    %c0_6 = arith.constant 0 : index
    %c0_7 = arith.constant 0 : index
    %9 = vector.load %arg7[%c0_6, %c0_7] : memref<16x128xf32, #tpu.memory_space<vmem>>, vector<16x128xf32>
    tpu.vector_store %arg7[%c0_6, %c0_7], %8 {strides = array<i32>} : memref<16x128xf32, #tpu.memory_space<vmem>>, vector<16x128xf32>,
    return
  }
  func.func @transform_0(%arg0: i32, %arg1: i32) -> (i32, i32) {
    %c0_i32 = arith.constant 0 : i32
    %c0_i32_0 = arith.constant 0 : i32
    return %arg0, %c0_i32 : i32, i32
  }
  func.func @transform_1(%arg0: i32, %arg1: i32) -> (i32, i32) {
    %c0_i32 = arith.constant 0 : i32
    %c0_i32_0 = arith.constant 0 : i32
    %c0_i32_1 = arith.constant 0 : i32
    return %c0_i32, %c0_i32_0 : i32, i32
  }
  func.func @transform_2(%arg0: i32, %arg1: i32) -> (i32, i32) {
    %c0_i32 = arith.constant 0 : i32
    %c0_i32_0 = arith.constant 0 : i32
    %c0_i32_1 = arith.constant 0 : i32
    return %c0_i32, %c0_i32_0 : i32, i32
  }
  func.func @transform_3(%arg0: i32, %arg1: i32) -> (i32, i32) {
    %c0_i32 = arith.constant 0 : i32
    %c0_i32_0 = arith.constant 0 : i32
    return %c0_i32, %arg1 : i32, i32
  }
  func.func @transform_4(%arg0: i32, %arg1: i32) -> (i32, i32) {
    %c0_i32 = arith.constant 0 : i32
    %c0_i32_0 = arith.constant 0 : i32
    return %c0_i32, %arg1 : i32, i32
  }
  func.func @transform_5(%arg0: i32, %arg1: i32) -> (i32, i32) {
    %c0_i32 = arith.constant 0 : i32
    return %arg0, %arg1 : i32, i32
  }
}

module attributes {stable_mosaic.version = 11 : i64} {
  func.func @classblock_kernel(%arg0: i32, %arg1: i32, %arg2: memref<16x128xbf16, #tpu.memory_space<vmem>>, %arg3: memref<128x128xbf16, #tpu.memory_space<vmem>>, %arg4: memref<1x128xf32, #tpu.memory_space<vmem>>, %arg5: memref<128x128xbf16, #tpu.memory_space<vmem>>, %arg6: memref<1x128xf32, #tpu.memory_space<vmem>>, %arg7: memref<16x128xf32, #tpu.memory_space<vmem>>, %arg8: memref<16x128xbf16, #tpu.memory_space<vmem>>) attributes {dimension_semantics = [#tpu.dimension_semantics<parallel>, #tpu.dimension_semantics<arbitrary>], iteration_bounds = array<i64: 1, 1>, scalar_prefetch = 0 : i64, scratch_operands = 1 : i64, tpu.core_type = #tpu.core_type<tc>, window_params = [{transform_indices = @transform_0, window_bounds = array<i64: 16, 128>}, {pipeline_mode = #tpu.pipeline_mode<synchronous>, transform_indices = @transform_1, window_bounds = array<i64: 128, 128>}, {pipeline_mode = #tpu.pipeline_mode<synchronous>, transform_indices = @transform_2, window_bounds = array<i64: 1, 128>}, {transform_indices = @transform_3, window_bounds = array<i64: 128, 128>}, {transform_indices = @transform_4, window_bounds = array<i64: 1, 128>}, {transform_indices = @transform_5, window_bounds = array<i64: 16, 128>}]} {
    %c0_i32 = arith.constant 0 : i32
    %0 = arith.cmpi eq, %arg1, %c0_i32 : i32
    %1 = arith.extui %0 : i1 to i32
    %c0_i32_0 = arith.constant 0 : i32
    %2 = arith.cmpi ne, %1, %c0_i32_0 : i32
    scf.if %2 {
      %c0_8 = arith.constant 0 : index
      %c0_9 = arith.constant 0 : index
      %10 = vector.load %arg2[%c0_8, %c0_9] : memref<16x128xbf16, #tpu.memory_space<vmem>>, vector<16x128xbf16>
      %c0_10 = arith.constant 0 : index
      %c0_11 = arith.constant 0 : index
      %11 = vector.load %arg3[%c0_10, %c0_11] : memref<128x128xbf16, #tpu.memory_space<vmem>>, vector<128x128xbf16>
      %cst_12 = arith.constant dense<0.000000e+00> : vector<16x128xf32>
      %12 = tpu.matmul %10, %11, %cst_12 {dimension_numbers = #tpu.dot_dimension_numbers<[1], [0], [0], [1], [0, 0, 1, 1], [], []>} : vector<16x128xbf16>, vector<128x128xbf16>, vector<16x128xf32> -> vector<16x128xf32>
      %c0_13 = arith.constant 0 : index
      %c0_14 = arith.constant 0 : index
      %13 = vector.load %arg4[%c0_13, %c0_14] : memref<1x128xf32, #tpu.memory_space<vmem>>, vector<1x128xf32>
      %14 = vector.broadcast %13 : vector<1x128xf32> to vector<16x128xf32>
      %15 = arith.addf %12, %14 : vector<16x128xf32>
      %16 = arith.truncf %15 : vector<16x128xf32> to vector<16x128xbf16>
      %c0_15 = arith.constant 0 : index
      %c0_16 = arith.constant 0 : index
      %17 = vector.load %arg8[%c0_15, %c0_16] : memref<16x128xbf16, #tpu.memory_space<vmem>>, vector<16x128xbf16>
      tpu.vector_store %arg8[%c0_15, %c0_16], %16 {strides = array<i32>} : memref<16x128xbf16, #tpu.memory_space<vmem>>, vector<16x128xbf16>,
    } else {
    }
    %c0 = arith.constant 0 : index
    %c0_1 = arith.constant 0 : index
    %3 = vector.load %arg8[%c0, %c0_1] : memref<16x128xbf16, #tpu.memory_space<vmem>>, vector<16x128xbf16>
    %c0_2 = arith.constant 0 : index
    %c0_3 = arith.constant 0 : index
    %4 = vector.load %arg5[%c0_2, %c0_3] : memref<128x128xbf16, #tpu.memory_space<vmem>>, vector<128x128xbf16>
    %cst = arith.constant dense<0.000000e+00> : vector<16x128xf32>
    %5 = tpu.matmul %3, %4, %cst {dimension_numbers = #tpu.dot_dimension_numbers<[1], [0], [0], [1], [0, 0, 1, 1], [], []>} : vector<16x128xbf16>, vector<128x128xbf16>, vector<16x128xf32> -> vector<16x128xf32>
    %c0_4 = arith.constant 0 : index
    %c0_5 = arith.constant 0 : index
    %6 = vector.load %arg6[%c0_4, %c0_5] : memref<1x128xf32, #tpu.memory_space<vmem>>, vector<1x128xf32>
    %7 = vector.broadcast %6 : vector<1x128xf32> to vector<16x128xf32>
    %8 = arith.addf %5, %7 : vector<16x128xf32>
    %c0_6 = arith.constant 0 : index
    %c0_7 = arith.constant 0 : index
    %9 = vector.load %arg7[%c0_6, %c0_7] : memref<16x128xf32, #tpu.memory_space<vmem>>, vector<16x128xf32>
    tpu.vector_store %arg7[%c0_6, %c0_7], %8 {strides = array<i32>} : memref<16x128xf32, #tpu.memory_space<vmem>>, vector<16x128xf32>,
    return
  }
  func.func @transform_0(%arg0: i32, %arg1: i32) -> (i32, i32) {
    %c0_i32 = arith.constant 0 : i32
    %c0_i32_0 = arith.constant 0 : i32
    return %arg0, %c0_i32 : i32, i32
  }
  func.func @transform_1(%arg0: i32, %arg1: i32) -> (i32, i32) {
    %c0_i32 = arith.constant 0 : i32
    %c0_i32_0 = arith.constant 0 : i32
    %c0_i32_1 = arith.constant 0 : i32
    return %c0_i32, %c0_i32_0 : i32, i32
  }
  func.func @transform_2(%arg0: i32, %arg1: i32) -> (i32, i32) {
    %c0_i32 = arith.constant 0 : i32
    %c0_i32_0 = arith.constant 0 : i32
    %c0_i32_1 = arith.constant 0 : i32
    return %c0_i32, %c0_i32_0 : i32, i32
  }
  func.func @transform_3(%arg0: i32, %arg1: i32) -> (i32, i32) {
    %c0_i32 = arith.constant 0 : i32
    %c0_i32_0 = arith.constant 0 : i32
    return %c0_i32, %arg1 : i32, i32
  }
  func.func @transform_4(%arg0: i32, %arg1: i32) -> (i32, i32) {
    %c0_i32 = arith.constant 0 : i32
    %c0_i32_0 = arith.constant 0 : i32
    return %c0_i32, %arg1 : i32, i32
  }
  func.func @transform_5(%arg0: i32, %arg1: i32) -> (i32, i32) {
    %c0_i32 = arith.constant 0 : i32
    return %arg0, %arg1 : i32, i32
  }
}

</mosaic_0001>

<llo_original>
// kernel: tpu_custom_call.1
$region0: #{tpu_custom_call.1}
  #allocation0 [shape = 'u32[]', space=smem, size = 0x4, offset = 0x4, fixed_abs, tag = 'smem constant byte address 0x4 - core index']
  #allocation1 [shape = 'u32[144,128]{1,0:T(1,128)}', space=vmem, size = 0x12000, scoped, tag = 'internal scratch']
  #allocation2 [shape = 'bf16[16,128]{1,0:T(16,128)(2,1)}', space=vmem, size = 0x1000, scoped, tag = 'scratch operand']
  %s0 = inlined_call_operand.hbm [shape: bf16[16,128], index: 0, kind: input, shape index: {}]
  %s1 = inlined_call_operand.hbm [shape: bf16[128,128], index: 1, kind: input, shape index: {}]
  %s2 = inlined_call_operand.vmem [shape: f32[1,128], index: 2, kind: input, shape index: {}]
  %s3 = inlined_call_operand.hbm [shape: bf16[128,128], index: 3, kind: input, shape index: {}]
  %s4 = inlined_call_operand.vmem [shape: f32[1,128], index: 4, kind: input, shape index: {}]
  %s5 = inlined_call_operand.hbm [shape: f32[16,128], index: 5, kind: output, shape index: {}]
  %s6 = sld [smem:[#allocation0]]
  $region46: #{tpu_custom_call.1} parent=0
    _
  %s8 = ssub.s32 1, %s6
  %s9 = scalar_select 0, %s8, %s6
  $region1: #{tpu_custom_call.1} parent=0
    #allocation3 [shape = 'u8[4096]{0}', space=vmem, size = 0x1000, scoped, tag = 'input window, operand 0, single buffered']
    #allocation4 [shape = 's32[1]{0}', space=sflag, size = 0x4, scoped, tag = 'scoped memory for tpu_custom_call.1']
    #allocation5 [shape = 's32[1]{0}', space=sflag, size = 0x4, scoped, tag = 'scoped memory for tpu_custom_call.1']
    #allocation6 [shape = 'u8[32768]{0}', space=vmem, size = 0x8000, scoped, tag = 'input window, operand 1, single buffered']
    #allocation7 [shape = 's32[1]{0}', space=sflag, size = 0x4, scoped, tag = 'scoped memory for tpu_custom_call.1']
    #allocation8 [shape = 'u8[32768]{0}', space=vmem, size = 0x8000, scoped, tag = 'input window, operand 3, single buffered']
    #allocation9 [shape = 'u8[8192]{0}', space=vmem, size = 0x2000, scoped, tag = 'output window, operand 0, single buffered']
    %10 = vsyncpa [#allocation4], 0
    %11 = vsyncpa [#allocation7], 0
    %12 = vsyncpa [#allocation5], 0
    // Predicated region
    $region2: #{tpu_custom_call.1} parent=1 // pred_check
      _
    $region3: #{tpu_custom_call.1} parent=1 // pred_check_branch
      %14 = sbr.rel (0) target = $region5
    $region4: #{tpu_custom_call.1} parent=1 // pred_region
      %s16 = ssub.s32 128, 128
      %17 = vsyncadd [#allocation4], %s16
      %s18 = sshll.u32 [#allocation3], 4
      %s19 = int_to_ptr.vmem [resolvable:$true] %s18
      %24 = dma.hbm_to_vmem [thread:$0]  %s0, 128, %s19, [#allocation4], 64, 64, 4
    $region5: #{tpu_custom_call.1} parent=1 // pred_fallthru
      _
    // Predicated region
    $region6: #{tpu_custom_call.1} parent=1 // pred_check
      _
    $region7: #{tpu_custom_call.1} parent=1 // pred_check_branch
      %26 = sbr.rel (0) target = $region9
    $region8: #{tpu_custom_call.1} parent=1 // pred_region
      %s28 = ssub.s32 1024, 1024
      %29 = vsyncadd [#allocation7], %s28
      %s30 = sshll.u32 [#allocation6], 4
      %s31 = int_to_ptr.vmem [resolvable:$true] %s30
      %36 = dma.hbm_to_vmem [thread:$0]  %s1, 1024, %s31, [#allocation7], 64, 64, 4
    $region9: #{tpu_custom_call.1} parent=1 // pred_fallthru
      _
    // Predicated region
    $region10: #{tpu_custom_call.1} parent=1 // pred_check
      _
    $region11: #{tpu_custom_call.1} parent=1 // pred_check_branch
      %38 = sbr.rel (0) target = $region13
    $region12: #{tpu_custom_call.1} parent=1 // pred_region
      _
    $region13: #{tpu_custom_call.1} parent=1 // pred_fallthru
      _
    // Predicated region
    $region14: #{tpu_custom_call.1} parent=1 // pred_check
      _
    $region15: #{tpu_custom_call.1} parent=1 // pred_check_branch
      %40 = sbr.rel (0) target = $region17
    $region16: #{tpu_custom_call.1} parent=1 // pred_region
      %s42 = ssub.s32 1024, 1024
      %43 = vsyncadd [#allocation7], %s42
      %s44 = sshll.u32 [#allocation8], 4
      %s45 = int_to_ptr.vmem [resolvable:$true] %s44
      %50 = dma.hbm_to_vmem [thread:$0]  %s3, 1024, %s45, [#allocation7], 64, 64, 4
    $region17: #{tpu_custom_call.1} parent=1 // pred_fallthru
      _
    // Predicated region
    $region18: #{tpu_custom_call.1} parent=1 // pred_check
      _
    $region19: #{tpu_custom_call.1} parent=1 // pred_check_branch
      %52 = sbr.rel (0) target = $region21
    $region20: #{tpu_custom_call.1} parent=1 // pred_region
      _
    $region21: #{tpu_custom_call.1} parent=1 // pred_fallthru
      _
    // Predicated region
    $region22: #{tpu_custom_call.1} parent=1 // pred_check
      _
    $region23: #{tpu_custom_call.1} parent=1 // pred_check_branch
      %54 = sbr.rel (0) target = $region25
    $region24: #{tpu_custom_call.1} parent=1 // pred_region
      %55 = dma.done [#allocation4], 128
    $region25: #{tpu_custom_call.1} parent=1 // pred_fallthru
      _
    // Predicated region
    $region26: #{tpu_custom_call.1} parent=1 // pred_check
      _
    $region27: #{tpu_custom_call.1} parent=1 // pred_check_branch
      %57 = sbr.rel (0) target = $region29
    $region28: #{tpu_custom_call.1} parent=1 // pred_region
      %58 = dma.done [#allocation7], 1024
    $region29: #{tpu_custom_call.1} parent=1 // pred_fallthru
      _
    // Predicated region
    $region30: #{tpu_custom_call.1} parent=1 // pred_check
      _
    $region31: #{tpu_custom_call.1} parent=1 // pred_check_branch
      %60 = sbr.rel (0) target = $region33
    $region32: #{tpu_custom_call.1} parent=1 // pred_region
      %61 = dma.done [#allocation7], 1024
    $region33: #{tpu_custom_call.1} parent=1 // pred_fallthru
      _
    %p63 = scmp.eq.s32.totalorder 0, 0
    // Predicated region
    $region34: #{tpu_custom_call.1} parent=1 // pred_check
      %p64 = pneg %p63
    $region35: #{tpu_custom_call.1} parent=1 // pred_check_branch
      %66 = sbr.rel (%p64) target = $region37
    $region36: #{tpu_custom_call.1} parent=1 // pred_region
      %v67 = vld [vmem:[#allocation3] sm:$0xf]
      %v68 = vld [vmem:[#allocation3 + $0x4] sm:$0xf]
      %v69 = vld [vmem:[#allocation6] sm:$0xf]
      %v70 = vld [vmem:[#allocation6 + $0x4] sm:$0xf]
      %v71 = vld [vmem:[#allocation6 + $0x8] sm:$0xf]
      %v72 = vld [vmem:[#allocation6 + $0xc] sm:$0xf]
      %v73 = vld [vmem:[#allocation6 + $0x10] sm:$0xf]
      %v74 = vld [vmem:[#allocation6 + $0x14] sm:$0xf]
      %v75 = vld [vmem:[#allocation6 + $0x18] sm:$0xf]
      %v76 = vld [vmem:[#allocation6 + $0x1c] sm:$0xf]
      %v77 = vld [vmem:[#allocation6 + $0x20] sm:$0xf]
      %v78 = vld [vmem:[#allocation6 + $0x24] sm:$0xf]
      %v79 = vld [vmem:[#allocation6 + $0x28] sm:$0xf]
      %v80 = vld [vmem:[#allocation6 + $0x2c] sm:$0xf]
      %v81 = vld [vmem:[#allocation6 + $0x30] sm:$0xf]
      %v82 = vld [vmem:[#allocation6 + $0x34] sm:$0xf]
      %v83 = vld [vmem:[#allocation6 + $0x38] sm:$0xf]
      %v84 = vld [vmem:[#allocation6 + $0x3c] sm:$0xf]
      %v85 = vld [vmem:[%s2] sm:$0x1]
      %v87 = vlaneseq
      %v88 = vshrl.u32 %v87, 7
      %v89 = vsub.s32 0, %v88
      %v90 = vrot.slane %v85, %v89
      %v94 = vunpack.c.l.b16 %v67
      %v95 = vunpack.c.l.b16 %v68
      %v96 = vpack.c.b16 %v95, %v94
      %v114 = vunpack.c.l.b16 %v69
      %v115 = vunpack.c.l.b16 %v70
      %v116 = vunpack.c.l.b16 %v71
      %v117 = vunpack.c.l.b16 %v72
      %v118 = vunpack.c.l.b16 %v73
      %v119 = vunpack.c.l.b16 %v74
      %v120 = vunpack.c.l.b16 %v75
      %v121 = vunpack.c.l.b16 %v76
      %v122 = vunpack.c.l.b16 %v77
      %v123 = vunpack.c.l.b16 %v78
      %v124 = vunpack.c.l.b16 %v79
      %v125 = vunpack.c.l.b16 %v80
      %v126 = vunpack.c.l.b16 %v81
      %v127 = vunpack.c.l.b16 %v82
      %v128 = vunpack.c.l.b16 %v83
      %v129 = vunpack.c.l.b16 %v84
      %v130 = vpack.c.b16 %v115, %v114
      %v131 = vpack.c.b16 %v117, %v116
      %v132 = vpack.c.b16 %v119, %v118
      %v133 = vpack.c.b16 %v121, %v120
      %v134 = vpack.c.b16 %v123, %v122
      %v135 = vpack.c.b16 %v125, %v124
      %v136 = vpack.c.b16 %v127, %v126
      %v137 = vpack.c.b16 %v129, %v128
      %146 = vmatprep.subr.bf16.mxu0 0
      %147 = vmatpush1.bf16.msra.mxu0 %v130
      %148 = vmatprep.subr.bf16.mxu0 0
      %149 = vmatpush1.bf16.msra.mxu0 %v131
      %150 = vmatprep.subr.bf16.mxu0 0
      %151 = vmatpush1.bf16.msra.mxu0 %v132
      %152 = vmatprep.subr.bf16.mxu0 0
      %153 = vmatpush1.bf16.msra.mxu0 %v133
      %154 = vmatprep.subr.bf16.mxu0 0
      %155 = vmatpush1.bf16.msra.mxu0 %v134
      %156 = vmatprep.subr.bf16.mxu0 0
      %157 = vmatpush1.bf16.msra.mxu0 %v135
      %158 = vmatprep.subr.bf16.mxu0 0
      %159 = vmatpush1.bf16.msra.mxu0 %v136
      %160 = vmatprep.subr.bf16.mxu0 0
      %161 = vmatpush1.bf16.msra.mxu0 %v137
      %162 = vmatprep.subr.bf16.mxu0 0
      %163 = vmatpush1.bf16.msra.mxu0 0
      %164 = vmatprep.subr.bf16.mxu0 0
      %165 = vmatpush1.bf16.msra.mxu0 0
      %166 = vmatprep.subr.bf16.mxu0 0
      %167 = vmatpush1.bf16.msra.mxu0 0
      %168 = vmatprep.subr.bf16.mxu0 0
      %169 = vmatpush1.bf16.msra.mxu0 0
      %170 = vmatprep.subr.bf16.mxu0 0
      %171 = vmatpush1.bf16.msra.mxu0 0
      %172 = vmatprep.subr.bf16.mxu0 0
      %173 = vmatpush1.bf16.msra.mxu0 0
      %174 = vmatprep.subr.bf16.mxu0 0
      %175 = vmatpush1.bf16.msra.mxu0 0
      %176 = vmatprep.subr.bf16.mxu0 0
      %177 = vmatpush1.bf16.msra.mxu0 0
      %178 = vmatprep.mubr.bf16.mxu0 0
      %179 = vmatmul.mubr.bf16.gmra.mrb[0].mxu0 %v96
      %v180 = vpop.f32.mrb[0].mxu0
      %v181 = vadd.f32 %v90, %v180
      %v182 = vpop.f32.mrb[0].mxu0
      %v183 = vpop.f32.mrb[0].mxu0
      %v184 = vadd.f32 %v90, %v183
      %v185 = vpop.f32.mrb[0].mxu0
      %186 = vdwg.mxu0
      %v187 = vpack.c.bf16 %v184, %v181
      %188 = vst [vmem:[#allocation2] sm:$0xff] %v187
    $region37: #{tpu_custom_call.1} parent=1 // pred_fallthru
      _
    %v189 = vld [vmem:[#allocation2] sm:$0xff]
    %v190 = vld [vmem:[#allocation8] sm:$0xf]
    %v191 = vld [vmem:[#allocation8 + $0x4] sm:$0xf]
    %v192 = vld [vmem:[#allocation8 + $0x8] sm:$0xf]
    %v193 = vld [vmem:[#allocation8 + $0xc] sm:$0xf]
    %v194 = vld [vmem:[#allocation8 + $0x10] sm:$0xf]
    %v195 = vld [vmem:[#allocation8 + $0x14] sm:$0xf]
    %v196 = vld [vmem:[#allocation8 + $0x18] sm:$0xf]
    %v197 = vld [vmem:[#allocation8 + $0x1c] sm:$0xf]
    %v198 = vld [vmem:[#allocation8 + $0x20] sm:$0xf]
    %v199 = vld [vmem:[#allocation8 + $0x24] sm:$0xf]
    %v200 = vld [vmem:[#allocation8 + $0x28] sm:$0xf]
    %v201 = vld [vmem:[#allocation8 + $0x2c] sm:$0xf]
    %v202 = vld [vmem:[#allocation8 + $0x30] sm:$0xf]
    %v203 = vld [vmem:[#allocation8 + $0x34] sm:$0xf]
    %v204 = vld [vmem:[#allocation8 + $0x38] sm:$0xf]
    %v205 = vld [vmem:[#allocation8 + $0x3c] sm:$0xf]
    %v206 = vld [vmem:[%s4] sm:$0x1]
    %v208 = vlaneseq
    %v209 = vshrl.u32 %v208, 7
    %v210 = vsub.s32 0, %v209
    %v211 = vrot.slane %v206, %v210
    %v229 = vunpack.c.l.b16 %v190
    %v230 = vunpack.c.l.b16 %v191
    %v231 = vunpack.c.l.b16 %v192
    %v232 = vunpack.c.l.b16 %v193
    %v233 = vunpack.c.l.b16 %v194
    %v234 = vunpack.c.l.b16 %v195
    %v235 = vunpack.c.l.b16 %v196
    %v236 = vunpack.c.l.b16 %v197
    %v237 = vunpack.c.l.b16 %v198
    %v238 = vunpack.c.l.b16 %v199
    %v239 = vunpack.c.l.b16 %v200
    %v240 = vunpack.c.l.b16 %v201
    %v241 = vunpack.c.l.b16 %v202
    %v242 = vunpack.c.l.b16 %v203
    %v243 = vunpack.c.l.b16 %v204
    %v244 = vunpack.c.l.b16 %v205
    %v245 = vpack.c.b16 %v230, %v229
    %v246 = vpack.c.b16 %v232, %v231
    %v247 = vpack.c.b16 %v234, %v233
    %v248 = vpack.c.b16 %v236, %v235
    %v249 = vpack.c.b16 %v238, %v237
    %v250 = vpack.c.b16 %v240, %v239
    %v251 = vpack.c.b16 %v242, %v241
    %v252 = vpack.c.b16 %v244, %v243
    %261 = vmatprep.subr.bf16.mxu0 0
    %262 = vmatpush1.bf16.msra.mxu0 %v245
    %263 = vmatprep.subr.bf16.mxu0 0
    %264 = vmatpush1.bf16.msra.mxu0 %v246
    %265 = vmatprep.subr.bf16.mxu0 0
    %266 = vmatpush1.bf16.msra.mxu0 %v247
    %267 = vmatprep.subr.bf16.mxu0 0
    %268 = vmatpush1.bf16.msra.mxu0 %v248
    %269 = vmatprep.subr.bf16.mxu0 0
    %270 = vmatpush1.bf16.msra.mxu0 %v249
    %271 = vmatprep.subr.bf16.mxu0 0
    %272 = vmatpush1.bf16.msra.mxu0 %v250
    %273 = vmatprep.subr.bf16.mxu0 0
    %274 = vmatpush1.bf16.msra.mxu0 %v251
    %275 = vmatprep.subr.bf16.mxu0 0
    %276 = vmatpush1.bf16.msra.mxu0 %v252
    %277 = vmatprep.subr.bf16.mxu0 0
    %278 = vmatpush1.bf16.msra.mxu0 0
    %279 = vmatprep.subr.bf16.mxu0 0
    %280 = vmatpush1.bf16.msra.mxu0 0
    %281 = vmatprep.subr.bf16.mxu0 0
    %282 = vmatpush1.bf16.msra.mxu0 0
    %283 = vmatprep.subr.bf16.mxu0 0
    %284 = vmatpush1.bf16.msra.mxu0 0
    %285 = vmatprep.subr.bf16.mxu0 0
    %286 = vmatpush1.bf16.msra.mxu0 0
    %287 = vmatprep.subr.bf16.mxu0 0
    %288 = vmatpush1.bf16.msra.mxu0 0
    %289 = vmatprep.subr.bf16.mxu0 0
    %290 = vmatpush1.bf16.msra.mxu0 0
    %291 = vmatprep.subr.bf16.mxu0 0
    %292 = vmatpush1.bf16.msra.mxu0 0
    %293 = vmatprep.mubr.bf16.mxu0 0
    %294 = vmatmul.mubr.bf16.gmra.mrb[0].mxu0 %v189
    %v295 = vpop.f32.mrb[0].mxu0
    %v296 = vadd.f32 %v211, %v295
    %v297 = vpop.f32.mrb[0].mxu0
    %v298 = vpop.f32.mrb[0].mxu0
    %v299 = vadd.f32 %v211, %v298
    %v300 = vpop.f32.mrb[0].mxu0
    %301 = vdwg.mxu0
    %302 = vst [vmem:[#allocation9] sm:$0xff] %v296
    %303 = vst [vmem:[#allocation9 + $0x8] sm:$0xff] %v299
    // Predicated region
    $region38: #{tpu_custom_call.1} parent=1 // pred_check
      _
    $region39: #{tpu_custom_call.1} parent=1 // pred_check_branch
      %305 = sbr.rel (0) target = $region41
    $region40: #{tpu_custom_call.1} parent=1 // pred_region
      %s307 = ssub.s32 256, 256
      %308 = vsyncadd [#allocation5], %s307
      %s309 = sshll.u32 [#allocation9], 4
      %s310 = int_to_ptr.vmem [resolvable:$true] %s309
      %315 = dma.vmem_to_hbm [thread:$0]  %s310, 256, %s5, [#allocation5], 128, 128, 8
    $region41: #{tpu_custom_call.1} parent=1 // pred_fallthru
      _
    // Predicated region
    $region42: #{tpu_custom_call.1} parent=1 // pred_check
      _
    $region43: #{tpu_custom_call.1} parent=1 // pred_check_branch
      %317 = sbr.rel (0) target = $region45
    $region44: #{tpu_custom_call.1} parent=1 // pred_region
      %318 = dma.done [#allocation5], 256
    $region45: #{tpu_custom_call.1} parent=1 // pred_fallthru
      _
    %319 = vsyncpa [#allocation4], 1
    %320 = vsyncpa [#allocation7], 1
    %321 = vsyncpa [#allocation5], 1

// kernel: tpu_custom_call.1
$region0: #{tpu_custom_call.1}
  #allocation0 [shape = 'u32[]', space=smem, size = 0x4, offset = 0x4, fixed_abs, tag = 'smem constant byte address 0x4 - core index']
  #allocation1 [shape = 'u32[144,128]{1,0:T(1,128)}', space=vmem, size = 0x12000, scoped, tag = 'internal scratch']
  #allocation2 [shape = 'bf16[16,128]{1,0:T(16,128)(2,1)}', space=vmem, size = 0x1000, scoped, tag = 'scratch operand']
  %s0 = inlined_call_operand.hbm [shape: bf16[16,128], index: 0, kind: input, shape index: {}]
  %s1 = inlined_call_operand.hbm [shape: bf16[128,128], index: 1, kind: input, shape index: {}]
  %s2 = inlined_call_operand.vmem [shape: f32[1,128], index: 2, kind: input, shape index: {}]
  %s3 = inlined_call_operand.hbm [shape: bf16[128,128], index: 3, kind: input, shape index: {}]
  %s4 = inlined_call_operand.vmem [shape: f32[1,128], index: 4, kind: input, shape index: {}]
  %s5 = inlined_call_operand.hbm [shape: f32[16,128], index: 5, kind: output, shape index: {}]
  %s6 = sld [smem:[#allocation0]]
  $region46: #{tpu_custom_call.1} parent=0
    _
  %s8 = ssub.s32 1, %s6
  %s9 = scalar_select 0, %s8, %s6
  $region1: #{tpu_custom_call.1} parent=0
    #allocation3 [shape = 'u8[4096]{0}', space=vmem, size = 0x1000, scoped, tag = 'input window, operand 0, single buffered']
    #allocation4 [shape = 's32[1]{0}', space=sflag, size = 0x4, scoped, tag = 'scoped memory for tpu_custom_call.1']
    #allocation5 [shape = 's32[1]{0}', space=sflag, size = 0x4, scoped, tag = 'scoped memory for tpu_custom_call.1']
    #allocation6 [shape = 'u8[32768]{0}', space=vmem, size = 0x8000, scoped, tag = 'input window, operand 1, single buffered']
    #allocation7 [shape = 's32[1]{0}', space=sflag, size = 0x4, scoped, tag = 'scoped memory for tpu_custom_call.1']
    #allocation8 [shape = 'u8[32768]{0}', space=vmem, size = 0x8000, scoped, tag = 'input window, operand 3, single buffered']
    #allocation9 [shape = 'u8[8192]{0}', space=vmem, size = 0x2000, scoped, tag = 'output window, operand 0, single buffered']
    %10 = vsyncpa [#allocation4], 0
    %11 = vsyncpa [#allocation7], 0
    %12 = vsyncpa [#allocation5], 0
    // Predicated region
    $region2: #{tpu_custom_call.1} parent=1 // pred_check
      _
    $region3: #{tpu_custom_call.1} parent=1 // pred_check_branch
      %14 = sbr.rel (0) target = $region5
    $region4: #{tpu_custom_call.1} parent=1 // pred_region
      %s16 = ssub.s32 128, 128
      %17 = vsyncadd [#allocation4], %s16
      %s18 = sshll.u32 [#allocation3], 4
      %s19 = int_to_ptr.vmem [resolvable:$true] %s18
      %24 = dma.hbm_to_vmem [thread:$0]  %s0, 128, %s19, [#allocation4], 64, 64, 4
    $region5: #{tpu_custom_call.1} parent=1 // pred_fallthru
      _
    // Predicated region
    $region6: #{tpu_custom_call.1} parent=1 // pred_check
      _
    $region7: #{tpu_custom_call.1} parent=1 // pred_check_branch
      %26 = sbr.rel (0) target = $region9
    $region8: #{tpu_custom_call.1} parent=1 // pred_region
      %s28 = ssub.s32 1024, 1024
      %29 = vsyncadd [#allocation7], %s28
      %s30 = sshll.u32 [#allocation6], 4
      %s31 = int_to_ptr.vmem [resolvable:$true] %s30
      %36 = dma.hbm_to_vmem [thread:$0]  %s1, 1024, %s31, [#allocation7], 64, 64, 4
    $region9: #{tpu_custom_call.1} parent=1 // pred_fallthru
      _
    // Predicated region
    $region10: #{tpu_custom_call.1} parent=1 // pred_check
      _
    $region11: #{tpu_custom_call.1} parent=1 // pred_check_branch
      %38 = sbr.rel (0) target = $region13
    $region12: #{tpu_custom_call.1} parent=1 // pred_region
      _
    $region13: #{tpu_custom_call.1} parent=1 // pred_fallthru
      _
    // Predicated region
    $region14: #{tpu_custom_call.1} parent=1 // pred_check
      _
    $region15: #{tpu_custom_call.1} parent=1 // pred_check_branch
      %40 = sbr.rel (0) target = $region17
    $region16: #{tpu_custom_call.1} parent=1 // pred_region
      %s42 = ssub.s32 1024, 1024
      %43 = vsyncadd [#allocation7], %s42
      %s44 = sshll.u32 [#allocation8], 4
      %s45 = int_to_ptr.vmem [resolvable:$true] %s44
      %50 = dma.hbm_to_vmem [thread:$0]  %s3, 1024, %s45, [#allocation7], 64, 64, 4
    $region17: #{tpu_custom_call.1} parent=1 // pred_fallthru
      _
    // Predicated region
    $region18: #{tpu_custom_call.1} parent=1 // pred_check
      _
    $region19: #{tpu_custom_call.1} parent=1 // pred_check_branch
      %52 = sbr.rel (0) target = $region21
    $region20: #{tpu_custom_call.1} parent=1 // pred_region
      _
    $region21: #{tpu_custom_call.1} parent=1 // pred_fallthru
      _
    // Predicated region
    $region22: #{tpu_custom_call.1} parent=1 // pred_check
      _
    $region23: #{tpu_custom_call.1} parent=1 // pred_check_branch
      %54 = sbr.rel (0) target = $region25
    $region24: #{tpu_custom_call.1} parent=1 // pred_region
      %55 = dma.done [#allocation4], 128
    $region25: #{tpu_custom_call.1} parent=1 // pred_fallthru
      _
    // Predicated region
    $region26: #{tpu_custom_call.1} parent=1 // pred_check
      _
    $region27: #{tpu_custom_call.1} parent=1 // pred_check_branch
      %57 = sbr.rel (0) target = $region29
    $region28: #{tpu_custom_call.1} parent=1 // pred_region
      %58 = dma.done [#allocation7], 1024
    $region29: #{tpu_custom_call.1} parent=1 // pred_fallthru
      _
    // Predicated region
    $region30: #{tpu_custom_call.1} parent=1 // pred_check
      _
    $region31: #{tpu_custom_call.1} parent=1 // pred_check_branch
      %60 = sbr.rel (0) target = $region33
    $region32: #{tpu_custom_call.1} parent=1 // pred_region
      %61 = dma.done [#allocation7], 1024
    $region33: #{tpu_custom_call.1} parent=1 // pred_fallthru
      _
    %p63 = scmp.eq.s32.totalorder 0, 0
    // Predicated region
    $region34: #{tpu_custom_call.1} parent=1 // pred_check
      %p64 = pneg %p63
    $region35: #{tpu_custom_call.1} parent=1 // pred_check_branch
      %66 = sbr.rel (%p64) target = $region37
    $region36: #{tpu_custom_call.1} parent=1 // pred_region
      %v67 = vld [vmem:[#allocation3] sm:$0xf]
      %v68 = vld [vmem:[#allocation3 + $0x4] sm:$0xf]
      %v69 = vld [vmem:[#allocation6] sm:$0xf]
      %v70 = vld [vmem:[#allocation6 + $0x4] sm:$0xf]
      %v71 = vld [vmem:[#allocation6 + $0x8] sm:$0xf]
      %v72 = vld [vmem:[#allocation6 + $0xc] sm:$0xf]
      %v73 = vld [vmem:[#allocation6 + $0x10] sm:$0xf]
      %v74 = vld [vmem:[#allocation6 + $0x14] sm:$0xf]
      %v75 = vld [vmem:[#allocation6 + $0x18] sm:$0xf]
      %v76 = vld [vmem:[#allocation6 + $0x1c] sm:$0xf]
      %v77 = vld [vmem:[#allocation6 + $0x20] sm:$0xf]
      %v78 = vld [vmem:[#allocation6 + $0x24] sm:$0xf]
      %v79 = vld [vmem:[#allocation6 + $0x28] sm:$0xf]
      %v80 = vld [vmem:[#allocation6 + $0x2c] sm:$0xf]
      %v81 = vld [vmem:[#allocation6 + $0x30] sm:$0xf]
      %v82 = vld [vmem:[#allocation6 + $0x34] sm:$0xf]
      %v83 = vld [vmem:[#allocation6 + $0x38] sm:$0xf]
      %v84 = vld [vmem:[#allocation6 + $0x3c] sm:$0xf]
      %v85 = vld [vmem:[%s2] sm:$0x1]
      %v87 = vlaneseq
      %v88 = vshrl.u32 %v87, 7
      %v89 = vsub.s32 0, %v88
      %v90 = vrot.slane %v85, %v89
      %v94 = vunpack.c.l.b16 %v67
      %v95 = vunpack.c.l.b16 %v68
      %v96 = vpack.c.b16 %v95, %v94
      %v114 = vunpack.c.l.b16 %v69
      %v115 = vunpack.c.l.b16 %v70
      %v116 = vunpack.c.l.b16 %v71
      %v117 = vunpack.c.l.b16 %v72
      %v118 = vunpack.c.l.b16 %v73
      %v119 = vunpack.c.l.b16 %v74
      %v120 = vunpack.c.l.b16 %v75
      %v121 = vunpack.c.l.b16 %v76
      %v122 = vunpack.c.l.b16 %v77
      %v123 = vunpack.c.l.b16 %v78
      %v124 = vunpack.c.l.b16 %v79
      %v125 = vunpack.c.l.b16 %v80
      %v126 = vunpack.c.l.b16 %v81
      %v127 = vunpack.c.l.b16 %v82
      %v128 = vunpack.c.l.b16 %v83
      %v129 = vunpack.c.l.b16 %v84
      %v130 = vpack.c.b16 %v115, %v114
      %v131 = vpack.c.b16 %v117, %v116
      %v132 = vpack.c.b16 %v119, %v118
      %v133 = vpack.c.b16 %v121, %v120
      %v134 = vpack.c.b16 %v123, %v122
      %v135 = vpack.c.b16 %v125, %v124
      %v136 = vpack.c.b16 %v127, %v126
      %v137 = vpack.c.b16 %v129, %v128
      %146 = vmatprep.subr.bf16.mxu0 0
      %147 = vmatpush1.bf16.msra.mxu0 %v130
      %148 = vmatprep.subr.bf16.mxu0 0
      %149 = vmatpush1.bf16.msra.mxu0 %v131
      %150 = vmatprep.subr.bf16.mxu0 0
      %151 = vmatpush1.bf16.msra.mxu0 %v132
      %152 = vmatprep.subr.bf16.mxu0 0
      %153 = vmatpush1.bf16.msra.mxu0 %v133
      %154 = vmatprep.subr.bf16.mxu0 0
      %155 = vmatpush1.bf16.msra.mxu0 %v134
      %156 = vmatprep.subr.bf16.mxu0 0
      %157 = vmatpush1.bf16.msra.mxu0 %v135
      %158 = vmatprep.subr.bf16.mxu0 0
      %159 = vmatpush1.bf16.msra.mxu0 %v136
      %160 = vmatprep.subr.bf16.mxu0 0
      %161 = vmatpush1.bf16.msra.mxu0 %v137
      %162 = vmatprep.subr.bf16.mxu0 0
      %163 = vmatpush1.bf16.msra.mxu0 0
      %164 = vmatprep.subr.bf16.mxu0 0
      %165 = vmatpush1.bf16.msra.mxu0 0
      %166 = vmatprep.subr.bf16.mxu0 0
      %167 = vmatpush1.bf16.msra.mxu0 0
      %168 = vmatprep.subr.bf16.mxu0 0
      %169 = vmatpush1.bf16.msra.mxu0 0
      %170 = vmatprep.subr.bf16.mxu0 0
      %171 = vmatpush1.bf16.msra.mxu0 0
      %172 = vmatprep.subr.bf16.mxu0 0
      %173 = vmatpush1.bf16.msra.mxu0 0
      %174 = vmatprep.subr.bf16.mxu0 0
      %175 = vmatpush1.bf16.msra.mxu0 0
      %176 = vmatprep.subr.bf16.mxu0 0
      %177 = vmatpush1.bf16.msra.mxu0 0
      %178 = vmatprep.mubr.bf16.mxu0 0
      %179 = vmatmul.mubr.bf16.gmra.mrb[0].mxu0 %v96
      %v180 = vpop.f32.mrb[0].mxu0
      %v181 = vadd.f32 %v90, %v180
      %v182 = vpop.f32.mrb[0].mxu0
      %v183 = vpop.f32.mrb[0].mxu0
      %v184 = vadd.f32 %v90, %v183
      %v185 = vpop.f32.mrb[0].mxu0
      %186 = vdwg.mxu0
      %v187 = vpack.c.bf16 %v184, %v181
      %188 = vst [vmem:[#allocation2] sm:$0xff] %v187
    $region37: #{tpu_custom_call.1} parent=1 // pred_fallthru
      _
    %v189 = vld [vmem:[#allocation2] sm:$0xff]
    %v190 = vld [vmem:[#allocation8] sm:$0xf]
    %v191 = vld [vmem:[#allocation8 + $0x4] sm:$0xf]
    %v192 = vld [vmem:[#allocation8 + $0x8] sm:$0xf]
    %v193 = vld [vmem:[#allocation8 + $0xc] sm:$0xf]
    %v194 = vld [vmem:[#allocation8 + $0x10] sm:$0xf]
    %v195 = vld [vmem:[#allocation8 + $0x14] sm:$0xf]
    %v196 = vld [vmem:[#allocation8 + $0x18] sm:$0xf]
    %v197 = vld [vmem:[#allocation8 + $0x1c] sm:$0xf]
    %v198 = vld [vmem:[#allocation8 + $0x20] sm:$0xf]
    %v199 = vld [vmem:[#allocation8 + $0x24] sm:$0xf]
    %v200 = vld [vmem:[#allocation8 + $0x28] sm:$0xf]
    %v201 = vld [vmem:[#allocation8 + $0x2c] sm:$0xf]
    %v202 = vld [vmem:[#allocation8 + $0x30] sm:$0xf]
    %v203 = vld [vmem:[#allocation8 + $0x34] sm:$0xf]
    %v204 = vld [vmem:[#allocation8 + $0x38] sm:$0xf]
    %v205 = vld [vmem:[#allocation8 + $0x3c] sm:$0xf]
    %v206 = vld [vmem:[%s4] sm:$0x1]
    %v208 = vlaneseq
    %v209 = vshrl.u32 %v208, 7
    %v210 = vsub.s32 0, %v209
    %v211 = vrot.slane %v206, %v210
    %v229 = vunpack.c.l.b16 %v190
    %v230 = vunpack.c.l.b16 %v191
    %v231 = vunpack.c.l.b16 %v192
    %v232 = vunpack.c.l.b16 %v193
    %v233 = vunpack.c.l.b16 %v194
    %v234 = vunpack.c.l.b16 %v195
    %v235 = vunpack.c.l.b16 %v196
    %v236 = vunpack.c.l.b16 %v197
    %v237 = vunpack.c.l.b16 %v198
    %v238 = vunpack.c.l.b16 %v199
    %v239 = vunpack.c.l.b16 %v200
    %v240 = vunpack.c.l.b16 %v201
    %v241 = vunpack.c.l.b16 %v202
    %v242 = vunpack.c.l.b16 %v203
    %v243 = vunpack.c.l.b16 %v204
    %v244 = vunpack.c.l.b16 %v205
    %v245 = vpack.c.b16 %v230, %v229
    %v246 = vpack.c.b16 %v232, %v231
    %v247 = vpack.c.b16 %v234, %v233
    %v248 = vpack.c.b16 %v236, %v235
    %v249 = vpack.c.b16 %v238, %v237
    %v250 = vpack.c.b16 %v240, %v239
    %v251 = vpack.c.b16 %v242, %v241
    %v252 = vpack.c.b16 %v244, %v243
    %261 = vmatprep.subr.bf16.mxu0 0
    %262 = vmatpush1.bf16.msra.mxu0 %v245
    %263 = vmatprep.subr.bf16.mxu0 0
    %264 = vmatpush1.bf16.msra.mxu0 %v246
    %265 = vmatprep.subr.bf16.mxu0 0
    %266 = vmatpush1.bf16.msra.mxu0 %v247
    %267 = vmatprep.subr.bf16.mxu0 0
    %268 = vmatpush1.bf16.msra.mxu0 %v248
    %269 = vmatprep.subr.bf16.mxu0 0
    %270 = vmatpush1.bf16.msra.mxu0 %v249
    %271 = vmatprep.subr.bf16.mxu0 0
    %272 = vmatpush1.bf16.msra.mxu0 %v250
    %273 = vmatprep.subr.bf16.mxu0 0
    %274 = vmatpush1.bf16.msra.mxu0 %v251
    %275 = vmatprep.subr.bf16.mxu0 0
    %276 = vmatpush1.bf16.msra.mxu0 %v252
    %277 = vmatprep.subr.bf16.mxu0 0
    %278 = vmatpush1.bf16.msra.mxu0 0
    %279 = vmatprep.subr.bf16.mxu0 0
    %280 = vmatpush1.bf16.msra.mxu0 0
    %281 = vmatprep.subr.bf16.mxu0 0
    %282 = vmatpush1.bf16.msra.mxu0 0
    %283 = vmatprep.subr.bf16.mxu0 0
    %284 = vmatpush1.bf16.msra.mxu0 0
    %285 = vmatprep.subr.bf16.mxu0 0
    %286 = vmatpush1.bf16.msra.mxu0 0
    %287 = vmatprep.subr.bf16.mxu0 0
    %288 = vmatpush1.bf16.msra.mxu0 0
    %289 = vmatprep.subr.bf16.mxu0 0
    %290 = vmatpush1.bf16.msra.mxu0 0
    %291 = vmatprep.subr.bf16.mxu0 0
    %292 = vmatpush1.bf16.msra.mxu0 0
    %293 = vmatprep.mubr.bf16.mxu0 0
    %294 = vmatmul.mubr.bf16.gmra.mrb[0].mxu0 %v189
    %v295 = vpop.f32.mrb[0].mxu0
    %v296 = vadd.f32 %v211, %v295
    %v297 = vpop.f32.mrb[0].mxu0
    %v298 = vpop.f32.mrb[0].mxu0
    %v299 = vadd.f32 %v211, %v298
    %v300 = vpop.f32.mrb[0].mxu0
    %301 = vdwg.mxu0
    %302 = vst [vmem:[#allocation9] sm:$0xff] %v296
    %303 = vst [vmem:[#allocation9 + $0x8] sm:$0xff] %v299
    // Predicated region
    $region38: #{tpu_custom_call.1} parent=1 // pred_check
      _
    $region39: #{tpu_custom_call.1} parent=1 // pred_check_branch
      %305 = sbr.rel (0) target = $region41
    $region40: #{tpu_custom_call.1} parent=1 // pred_region
      %s307 = ssub.s32 256, 256
      %308 = vsyncadd [#allocation5], %s307
      %s309 = sshll.u32 [#allocation9], 4
      %s310 = int_to_ptr.vmem [resolvable:$true] %s309
      %315 = dma.vmem_to_hbm [thread:$0]  %s310, 256, %s5, [#allocation5], 128, 128, 8
    $region41: #{tpu_custom_call.1} parent=1 // pred_fallthru
      _
    // Predicated region
    $region42: #{tpu_custom_call.1} parent=1 // pred_check
      _
    $region43: #{tpu_custom_call.1} parent=1 // pred_check_branch
      %317 = sbr.rel (0) target = $region45
    $region44: #{tpu_custom_call.1} parent=1 // pred_region
      %318 = dma.done [#allocation5], 256
    $region45: #{tpu_custom_call.1} parent=1 // pred_fallthru
      _
    %319 = vsyncpa [#allocation4], 1
    %320 = vsyncpa [#allocation7], 1
    %321 = vsyncpa [#allocation5], 1

</llo_original>
